<compile_context>
chip_gen: v5e
topology: v5e:2x2
jax: 0.10.0
libtpu: 0.0.40
codegen_flags: <defaults>
</compile_context>

<pallas_src>
import functools

import jax
import jax.numpy as jnp
from jax.experimental import pallas as pl
from jax.experimental.pallas import tpu as pltpu

_LANE = 128
_SUBLANE = 8


def _round_up(x, m):
    return ((x + m - 1) // m) * m


# ---------------------------------------------------------------------------
# Kernels: one (tm, tn) output tile = full-K matmul (+ bias).  No reduction
# grid axis and no accumulator scratch -- a re-ID head's in_features always
# fits one VMEM tile.
# ---------------------------------------------------------------------------
def _linear_bias_kernel(x_ref, wt_ref, b_ref, o_ref):
    x = x_ref[...].astype(wt_ref.dtype)          # no-op for f32 weights
    acc = jnp.dot(x, wt_ref[...], preferred_element_type=jnp.float32)
    o_ref[...] = (acc + b_ref[...]).astype(o_ref.dtype)


def _linear_kernel(x_ref, wt_ref, o_ref):
    x = x_ref[...].astype(wt_ref.dtype)
    acc = jnp.dot(x, wt_ref[...], preferred_element_type=jnp.float32)
    o_ref[...] = acc.astype(o_ref.dtype)


# ---------------------------------------------------------------------------
# Generation-aware VMEM sizing.
# ---------------------------------------------------------------------------
def _vmem_budget_and_limit():
    phys = None
    try:
        info = pltpu.get_tpu_info()
        for attr in ("vmem_capacity_bytes", "vmem_size_bytes", "vmem_bytes"):
            val = getattr(info, attr, None)
            if val:
                phys = int(val)
                break
    except Exception:
        phys = None
    if not phys:
        phys = 64 * 1024 * 1024  # conservative default: v7x per-TensorCore VMEM
    # Explicit scoped-VMEM limit (v5e's 16 MiB default would otherwise clip
    # tiles); keep headroom for Mosaic-internal scratch.
    limit = min(phys * 5 // 8, phys - (8 << 20))      # 40 MiB on 64 MiB parts, 80 MiB on 128 MiB parts
    limit = max(limit, 16 << 20)
    budget = max(limit - (4 << 20), 8 << 20)          # double-buffered tile footprint cap
    return budget, limit


def _select_tiles(m, k, n, x_bytes, w_bytes, has_bias, tm_target, tn_target, budget):
    # M tile: full batch when it fits (single unmasked block), otherwise a
    # sublane-aligned tile with a ragged (masked) last block.
    tm = m if m <= tm_target else tm_target
    # N tile: full out_features when it fits (no masking/padding needed),
    # otherwise a lane-aligned tile with a ragged last block.
    tn = n if n <= tn_target else tn_target

    def footprint(tm_, tn_):  # double-buffered in/out tiles, f32 output
        f = 2 * (tm_ * k * x_bytes + k * tn_ * w_bytes + tm_ * tn_ * 4)
        if has_bias:
            f += 2 * tn_ * 4
        return f

    # Shrink the lane (N) tile first -- keeps output rows lane-dense as long
    # as possible; only then shrink the M tile.
    while footprint(tm, tn) > budget:
        new_tn = ((tn // 2) // _LANE) * _LANE
        if new_tn < _LANE:
            break
        tn = new_tn
    while footprint(tm, tn) > budget:
        new_tm = ((tm // 2) // _SUBLANE) * _SUBLANE
        if new_tm < _SUBLANE:
            break
        tm = new_tm
    return tm, tn


@functools.partial(jax.jit, static_argnames=("tm_target", "tn_target"))
def softmax_head_forward(x, weight_t, bias2d=None, *, tm_target=256, tn_target=512):
    """out = x @ weight.T + bias   (F.linear semantics).

    x:        (M, K)  float32
    weight_t: (K, N)  float32 or bfloat16 -- PRE-transposed once at init
    bias2d:   (1, N)  float32 or None
    """
    m, k = x.shape
    k2, n = weight_t.shape
    assert k == k2, "in_features mismatch"

    x_bytes = jnp.dtype(x.dtype).itemsize
    w_bytes = jnp.dtype(weight_t.dtype).itemsize

    budget, vmem_limit = _vmem_budget_and_limit()
    if budget >= (48 << 20):
        # Plenty of VMEM (128 MiB v5e/v6e parts): wider lane tiles = fewer grid
        # steps and fewer x re-reads.  Purely a perf knob.
        tn_target = max(tn_target, 1024)

    tm, tn = _select_tiles(m, k, n, x_bytes, w_bytes, bias2d is not None,
                           tm_target, tn_target, budget)

    grid_m = pl.cdiv(m, tm)
    grid_n = pl.cdiv(n, tn)
    # M innermost: the (K, tn) weight tile (the big operand) is fetched once per
    # N tile and held across every M tile; only the small x tiles re-stream.
    grid = (grid_n, grid_m)

    in_specs = [
        pl.BlockSpec((tm, k), lambda j, i: (i, 0)),   # x tile (full K)
        pl.BlockSpec((k, tn), lambda j, i: (0, j)),   # weight.T tile, reused over i
    ]
    operands = [x, weight_t]
    if bias2d is not None:
        in_specs.append(pl.BlockSpec((1, tn), lambda j, i: (0, j)))
        operands.append(bias2d)
        kernel = _linear_bias_kernel
    else:
        kernel = _linear_kernel

    out = pl.pallas_call(
        kernel,
        out_shape=jax.ShapeDtypeStruct((m, n), x.dtype),
        grid_spec=pltpu.PrefetchScalarGridSpec(
            num_scalar_prefetch=0,
            grid=grid,
            in_specs=in_specs,
            out_specs=pl.BlockSpec((tm, tn), lambda j, i: (i, j)),
        ),
        compiler_params=pltpu.CompilerParams(
            dimension_semantics=("parallel", "parallel"),
            vmem_limit_bytes=int(vmem_limit),
        ),
        cost_estimate=pl.CostEstimate(
            flops=2 * (grid_m * tm) * (grid_n * tn) * k,
            transcendentals=0,
            bytes_accessed=(grid_n * m * k * x_bytes     # x re-read once per N tile
                            + k * n * w_bytes            # weight streamed once
                            + m * n * x_bytes            # output written once
                            + (n * 4 if bias2d is not None else 0)),
        ),
    )(*operands)
    return out


class SoftmaxHeadPallas:
    """JAX/Pallas port of SoftmaxHead (device_id=None path).

    The weight is stored once at init in MXU-ready (K, N) layout, optionally in
    bf16 (param_dtype, default) to halve the dominant HBM stream; the matmul
    accumulates in float32 and the output is float32.  Use
    param_dtype=jnp.float32 for bit-faithful F.linear numerics.
    """

    def __init__(self, in_features, out_features, with_bias=False, key=None,
                 param_dtype=jnp.bfloat16):
        self.in_features = in_features
        self.out_features = out_features
        key = jax.random.PRNGKey(0) if key is None else key
        # nn.init.normal_(weight, std=0.001) -- keep an f32 master copy.
        self.weight = 0.001 * jax.random.normal(
            key, (out_features, in_features), dtype=jnp.float32
        )
        # MXU-ready layout computed ONCE (no per-call transpose / pad / cast).
        self.weight_t = self.weight.T.astype(param_dtype)        # (K, N)
        self.with_bias = with_bias
        if with_bias:
            # nn.init.constant_(bias, 0.0)
            self.bias = jnp.zeros((out_features,), dtype=jnp.float32)
            self.bias2d = self.bias.reshape(1, out_features)      # lane-dense row
        else:
            self.bias = None
            self.bias2d = None

    def __call__(self, x, label=None):
        # `label` is unused in the forward math (as in the PyTorch module).
        # TODO(synk): the device_id (multi-GPU model-parallel) branch is not
        # translated; it is a data-placement variant of the same linear op.
        lead = x.shape[:-1]
        x2 = x.reshape(-1, self.in_features)
        out = softmax_head_forward(x2, self.weight_t, self.bias2d)
        return out.reshape(*lead, self.out_features)


if __name__ == "__main__":
    key = jax.random.PRNGKey(0)
    kx, kw, kw2, kx2 = jax.random.split(key, 4)

    batch, in_features, out_features = 16, 128, 256
    x = jax.random.normal(kx, (batch, in_features), dtype=jnp.float32)
    label = jnp.zeros((batch,), dtype=jnp.int32)   # unused by forward

    # --- exact-f32 mode: F.linear semantics, tight tolerance -----------------
    head_f32 = SoftmaxHeadPallas(in_features, out_features, with_bias=True,
                                 key=kw, param_dtype=jnp.float32)
    out = jax.block_until_ready(head_f32(x, label))
    ref = x @ head_f32.weight.T + head_f32.bias[None, :]
    assert out.shape == (batch, out_features)
    assert jnp.allclose(out, ref, atol=1e-5, rtol=1e-5)

    # --- default bf16-weight mode (bandwidth-optimized), bias-free kernel ----
    head_bf16 = SoftmaxHeadPallas(in_features, out_features, with_bias=False, key=kw)
    out_b = jax.block_until_ready(head_bf16(x, label))
    ref_b = jnp.dot(x.astype(jnp.bfloat16),
                    head_bf16.weight.T.astype(jnp.bfloat16),
                    preferred_element_type=jnp.float32)
    assert out_b.shape == (batch, out_features)
    assert jnp.allclose(out_b, ref_b, atol=1e-4, rtol=1e-3)
    # still close to the exact-f32 math
    assert jnp.allclose(out_b, x @ head_bf16.weight.T, atol=3e-3, rtol=3e-2)

    # --- ragged shapes: M > tm (masked last row tile) and N > tn (masked last
    # column tile), exercising M-innermost weight reuse with no padding/slice --
    m3, n3 = 300, 640
    x3 = jax.random.normal(kx2, (m3, in_features), dtype=jnp.float32)
    head3 = SoftmaxHeadPallas(in_features, n3, with_bias=True, key=kw2,
                              param_dtype=jnp.float32)
    out3 = jax.block_until_ready(head3(x3, None))
    ref3 = x3 @ head3.weight.T + head3.bias[None, :]
    assert out3.shape == (m3, n3)
    assert jnp.allclose(out3, ref3, atol=1e-5, rtol=1e-5)

    print("KERNEL_OK")
</pallas_src>

<mosaic_0001>
module attributes {stable_mosaic.version = 11 : i64} {
  func.func @_linear_bias_kernel(%arg0: i32, %arg1: i32, %arg2: memref<16x128xf32, #tpu.memory_space<vmem>>, %arg3: memref<128x256xf32, #tpu.memory_space<vmem>>, %arg4: memref<1x256xf32, #tpu.memory_space<vmem>>, %arg5: memref<16x256xf32, #tpu.memory_space<vmem>>) attributes {dimension_semantics = [#tpu.dimension_semantics<parallel>, #tpu.dimension_semantics<parallel>], iteration_bounds = array<i64: 1, 1>, scalar_prefetch = 0 : i64, scratch_operands = 0 : i64, tpu.core_type = #tpu.core_type<tc>, window_params = [{transform_indices = @transform_0, window_bounds = array<i64: 16, 128>}, {transform_indices = @transform_1, window_bounds = array<i64: 128, 256>}, {transform_indices = @transform_2, window_bounds = array<i64: 1, 256>}, {transform_indices = @transform_3, window_bounds = array<i64: 16, 256>}]} {
    %c0 = arith.constant 0 : index
    %c0_0 = arith.constant 0 : index
    %0 = vector.load %arg2[%c0, %c0_0] : memref<16x128xf32, #tpu.memory_space<vmem>>, vector<16x128xf32>
    %c0_1 = arith.constant 0 : index
    %c0_2 = arith.constant 0 : index
    %1 = vector.load %arg3[%c0_1, %c0_2] : memref<128x256xf32, #tpu.memory_space<vmem>>, vector<128x256xf32>
    %cst = arith.constant dense<0.000000e+00> : vector<16x256xf32>
    %2 = tpu.matmul %0, %1, %cst {dimension_numbers = #tpu.dot_dimension_numbers<[1], [0], [0], [1], [0, 0, 1, 1], [], []>} : vector<16x128xf32>, vector<128x256xf32>, vector<16x256xf32> -> vector<16x256xf32>
    %c0_3 = arith.constant 0 : index
    %c0_4 = arith.constant 0 : index
    %3 = vector.load %arg4[%c0_3, %c0_4] : memref<1x256xf32, #tpu.memory_space<vmem>>, vector<1x256xf32>
    %4 = vector.broadcast %3 : vector<1x256xf32> to vector<16x256xf32>
    %5 = arith.addf %2, %4 : vector<16x256xf32>
    %c0_5 = arith.constant 0 : index
    %c0_6 = arith.constant 0 : index
    %6 = vector.load %arg5[%c0_5, %c0_6] : memref<16x256xf32, #tpu.memory_space<vmem>>, vector<16x256xf32>
    tpu.vector_store %arg5[%c0_5, %c0_6], %5 {strides = array<i32>} : memref<16x256xf32, #tpu.memory_space<vmem>>, vector<16x256xf32>,
    return
  }
  func.func @transform_0(%arg0: i32, %arg1: i32) -> (i32, i32) {
    %c0_i32 = arith.constant 0 : i32
    %c0_i32_0 = arith.constant 0 : i32
    return %arg1, %c0_i32 : i32, i32
  }
  func.func @transform_1(%arg0: i32, %arg1: i32) -> (i32, i32) {
    %c0_i32 = arith.constant 0 : i32
    %c0_i32_0 = arith.constant 0 : i32
    return %c0_i32, %arg0 : i32, i32
  }
  func.func @transform_2(%arg0: i32, %arg1: i32) -> (i32, i32) {
    %c0_i32 = arith.constant 0 : i32
    %c0_i32_0 = arith.constant 0 : i32
    return %c0_i32, %arg0 : i32, i32
  }
  func.func @transform_3(%arg0: i32, %arg1: i32) -> (i32, i32) {
    %c0_i32 = arith.constant 0 : i32
    return %arg1, %arg0 : i32, i32
  }
}

</mosaic_0001>

<llo_original>
// kernel: softmax_head_forward.1
$region0: #{softmax_head_forward.1}
  #allocation0 [shape = 'u32[]', space=smem, size = 0x4, offset = 0x4, fixed_abs, tag = 'smem constant byte address 0x4 - core index']
  #allocation1 [shape = 'u32[72,128]{1,0:T(1,128)}', space=vmem, size = 0x9000, scoped, tag = 'internal scratch']
  %s0 = inlined_call_operand.hbm [shape: f32[16,128], index: 0, kind: input, shape index: {}]
  %s1 = inlined_call_operand.hbm [shape: f32[128,256], index: 1, kind: input, shape index: {}]
  %s2 = inlined_call_operand.hbm [shape: f32[1,256], index: 2, kind: input, shape index: {}]
  %s3 = inlined_call_operand.hbm [shape: f32[16,256], index: 3, kind: output, shape index: {}]
  %s4 = sld [smem:[#allocation0]]
  $region34: #{softmax_head_forward.1} parent=0
    _
  %s6 = ssub.s32 1, %s4
  %s7 = scalar_select 0, %s6, %s4
  $region1: #{softmax_head_forward.1} parent=0
    #allocation2 [shape = 'u8[8192]{0}', space=vmem, size = 0x2000, scoped, tag = 'input window, operand 0, single buffered']
    #allocation3 [shape = 's32[1]{0}', space=sflag, size = 0x4, scoped, tag = 'scoped memory for softmax_head_forward.1']
    #allocation4 [shape = 's32[1]{0}', space=sflag, size = 0x4, scoped, tag = 'scoped memory for softmax_head_forward.1']
    #allocation5 [shape = 'u8[131072]{0}', space=vmem, size = 0x20000, scoped, tag = 'input window, operand 1, single buffered']
    #allocation6 [shape = 's32[1]{0}', space=sflag, size = 0x4, scoped, tag = 'scoped memory for softmax_head_forward.1']
    #allocation7 [shape = 'u8[1024]{0}', space=vmem, size = 0x400, scoped, tag = 'input window, operand 2, single buffered']
    #allocation8 [shape = 'u8[16384]{0}', space=vmem, size = 0x4000, scoped, tag = 'output window, operand 0, single buffered']
    %8 = vsyncpa [#allocation3], 0
    %9 = vsyncpa [#allocation6], 0
    %10 = vsyncpa [#allocation4], 0
    // Predicated region
    $region2: #{softmax_head_forward.1} parent=1 // pred_check
      _
    $region3: #{softmax_head_forward.1} parent=1 // pred_check_branch
      %12 = sbr.rel (0) target = $region5
    $region4: #{softmax_head_forward.1} parent=1 // pred_region
      %14 = vsyncadd [#allocation3], 0
      %s15 = sshll.u32 %s0, 4
      %s16 = int_to_ptr.hbm [resolvable:$true] %s15
      %s17 = sshll.u32 [#allocation2], 4
      %s18 = int_to_ptr.vmem [resolvable:$true] %s17
      %23 = dma.hbm_to_vmem [thread:$0]  %s16, 256, %s18, [#allocation3], 128, 128, 8
    $region5: #{softmax_head_forward.1} parent=1 // pred_fallthru
      _
    // Predicated region
    $region6: #{softmax_head_forward.1} parent=1 // pred_check
      _
    $region7: #{softmax_head_forward.1} parent=1 // pred_check_branch
      %25 = sbr.rel (0) target = $region9
    $region8: #{softmax_head_forward.1} parent=1 // pred_region
      %27 = vsyncadd [#allocation6], 0
      %s28 = sshll.u32 %s1, 4
      %s29 = int_to_ptr.hbm [resolvable:$true] %s28
      %s30 = sshll.u32 [#allocation5], 4
      %s31 = int_to_ptr.vmem [resolvable:$true] %s30
      %36 = dma.hbm_to_vmem [thread:$0]  %s29, 4096, %s31, [#allocation6], 256, 256, 16
    $region9: #{softmax_head_forward.1} parent=1 // pred_fallthru
      _
    // Predicated region
    $region10: #{softmax_head_forward.1} parent=1 // pred_check
      _
    $region11: #{softmax_head_forward.1} parent=1 // pred_check_branch
      %38 = sbr.rel (0) target = $region13
    $region12: #{softmax_head_forward.1} parent=1 // pred_region
      %40 = vsyncadd [#allocation6], 0
      %s42 = sshll.u32 %s2, 4
      %s43 = int_to_ptr.hbm [resolvable:$true] %s42
      %s44 = sshll.u32 [#allocation7], 4
      %s45 = int_to_ptr.vmem [resolvable:$true] %s44
      %47 = dma.hbm_to_vmem [thread:$0]  %s43, 32, %s45, [#allocation6]
    $region13: #{softmax_head_forward.1} parent=1 // pred_fallthru
      _
    // Predicated region
    $region14: #{softmax_head_forward.1} parent=1 // pred_check
      _
    $region15: #{softmax_head_forward.1} parent=1 // pred_check_branch
      %49 = sbr.rel (0) target = $region17
    $region16: #{softmax_head_forward.1} parent=1 // pred_region
      %51 = dma.done [#allocation3], 256
    $region17: #{softmax_head_forward.1} parent=1 // pred_fallthru
      _
    // Predicated region
    $region18: #{softmax_head_forward.1} parent=1 // pred_check
      _
    $region19: #{softmax_head_forward.1} parent=1 // pred_check_branch
      %53 = sbr.rel (0) target = $region21
    $region20: #{softmax_head_forward.1} parent=1 // pred_region
      %55 = dma.done [#allocation6], 4096
    $region21: #{softmax_head_forward.1} parent=1 // pred_fallthru
      _
    // Predicated region
    $region22: #{softmax_head_forward.1} parent=1 // pred_check
      _
    $region23: #{softmax_head_forward.1} parent=1 // pred_check_branch
      %57 = sbr.rel (0) target = $region25
    $region24: #{softmax_head_forward.1} parent=1 // pred_region
      %59 = dma.done [#allocation6], 32
    $region25: #{softmax_head_forward.1} parent=1 // pred_fallthru
      _
    %v60 = vld [vmem:[#allocation2] sm:$0xff]
    %v61 = vld [vmem:[#allocation2 + $0x8] sm:$0xff]
    %v62 = vld [vmem:[#allocation5] sm:$0xff]
    %v63 = vld [vmem:[#allocation5 + $0x8] sm:$0xff]
    %v64 = vld [vmem:[#allocation5 + $0x10] sm:$0xff]
    %v65 = vld [vmem:[#allocation5 + $0x18] sm:$0xff]
    %v66 = vld [vmem:[#allocation5 + $0x20] sm:$0xff]
    %v67 = vld [vmem:[#allocation5 + $0x28] sm:$0xff]
    %v68 = vld [vmem:[#allocation5 + $0x30] sm:$0xff]
    %v69 = vld [vmem:[#allocation5 + $0x38] sm:$0xff]
    %v70 = vld [vmem:[#allocation5 + $0x40] sm:$0xff]
    %v71 = vld [vmem:[#allocation5 + $0x48] sm:$0xff]
    %v72 = vld [vmem:[#allocation5 + $0x50] sm:$0xff]
    %v73 = vld [vmem:[#allocation5 + $0x58] sm:$0xff]
    %v74 = vld [vmem:[#allocation5 + $0x60] sm:$0xff]
    %v75 = vld [vmem:[#allocation5 + $0x68] sm:$0xff]
    %v76 = vld [vmem:[#allocation5 + $0x70] sm:$0xff]
    %v77 = vld [vmem:[#allocation5 + $0x78] sm:$0xff]
    %v78 = vld [vmem:[#allocation5 + $0x80] sm:$0xff]
    %v79 = vld [vmem:[#allocation5 + $0x88] sm:$0xff]
    %v80 = vld [vmem:[#allocation5 + $0x90] sm:$0xff]
    %v81 = vld [vmem:[#allocation5 + $0x98] sm:$0xff]
    %v82 = vld [vmem:[#allocation5 + $0xa0] sm:$0xff]
    %v83 = vld [vmem:[#allocation5 + $0xa8] sm:$0xff]
    %v84 = vld [vmem:[#allocation5 + $0xb0] sm:$0xff]
    %v85 = vld [vmem:[#allocation5 + $0xb8] sm:$0xff]
    %v86 = vld [vmem:[#allocation5 + $0xc0] sm:$0xff]
    %v87 = vld [vmem:[#allocation5 + $0xc8] sm:$0xff]
    %v88 = vld [vmem:[#allocation5 + $0xd0] sm:$0xff]
    %v89 = vld [vmem:[#allocation5 + $0xd8] sm:$0xff]
    %v90 = vld [vmem:[#allocation5 + $0xe0] sm:$0xff]
    %v91 = vld [vmem:[#allocation5 + $0xe8] sm:$0xff]
    %v92 = vld [vmem:[#allocation5 + $0xf0] sm:$0xff]
    %v93 = vld [vmem:[#allocation5 + $0xf8] sm:$0xff]
    %v94 = vld [vmem:[#allocation7] sm:$0x3]
    %v96 = vperm.slane %v94, 0
    %v97 = vperm.slane %v94, 1
    %100 = vmatpush.msra.mxu0 %v92
    %101 = vmatpush.msra.mxu0 %v90
    %102 = vmatpush.msra.mxu0 %v88
    %103 = vmatpush.msra.mxu0 %v86
    %104 = vmatpush.msra.mxu0 %v84
    %105 = vmatpush.msra.mxu0 %v82
    %106 = vmatpush.msra.mxu0 %v80
    %107 = vmatpush.msra.mxu0 %v78
    %108 = vmatpush.msra.mxu0 %v76
    %109 = vmatpush.msra.mxu0 %v74
    %110 = vmatpush.msra.mxu0 %v72
    %111 = vmatpush.msra.mxu0 %v70
    %112 = vmatpush.msra.mxu0 %v68
    %113 = vmatpush.msra.mxu0 %v66
    %114 = vmatpush.msra.mxu0 %v64
    %115 = vmatpush.msra.mxu0 %v62
    %116 = vmatmul.f32.gmra.mxu0 %v60
    %v117 = vpop.f32.mrf.mxu0
    %v118 = vadd.f32 %v96, %v117
    %119 = vmatmul.f32.gmra.mxu0 %v61
    %v120 = vpop.f32.mrf.mxu0
    %v121 = vadd.f32 %v96, %v120
    %122 = vdwg.mxu0
    %123 = vmatpush.msra.mxu0 %v93
    %124 = vmatpush.msra.mxu0 %v91
    %125 = vmatpush.msra.mxu0 %v89
    %126 = vmatpush.msra.mxu0 %v87
    %127 = vmatpush.msra.mxu0 %v85
    %128 = vmatpush.msra.mxu0 %v83
    %129 = vmatpush.msra.mxu0 %v81
    %130 = vmatpush.msra.mxu0 %v79
    %131 = vmatpush.msra.mxu0 %v77
    %132 = vmatpush.msra.mxu0 %v75
    %133 = vmatpush.msra.mxu0 %v73
    %134 = vmatpush.msra.mxu0 %v71
    %135 = vmatpush.msra.mxu0 %v69
    %136 = vmatpush.msra.mxu0 %v67
    %137 = vmatpush.msra.mxu0 %v65
    %138 = vmatpush.msra.mxu0 %v63
    %139 = vmatmul.f32.gmra.mxu0 %v60
    %v140 = vpop.f32.mrf.mxu0
    %v141 = vadd.f32 %v97, %v140
    %142 = vmatmul.f32.gmra.mxu0 %v61
    %v143 = vpop.f32.mrf.mxu0
    %v144 = vadd.f32 %v97, %v143
    %145 = vdwg.mxu0
    %146 = vst [vmem:[#allocation8] sm:$0xff] %v118
    %147 = vst [vmem:[#allocation8 + $0x8] sm:$0xff] %v141
    %148 = vst [vmem:[#allocation8 + $0x10] sm:$0xff] %v121
    %149 = vst [vmem:[#allocation8 + $0x18] sm:$0xff] %v144
    // Predicated region
    $region26: #{softmax_head_forward.1} parent=1 // pred_check
      _
    $region27: #{softmax_head_forward.1} parent=1 // pred_check_branch
      %151 = sbr.rel (0) target = $region29
    $region28: #{softmax_head_forward.1} parent=1 // pred_region
      %153 = vsyncadd [#allocation4], 0
      %s154 = sshll.u32 [#allocation8], 4
      %s155 = int_to_ptr.vmem [resolvable:$true] %s154
      %s156 = sshll.u32 %s3, 4
      %s157 = int_to_ptr.hbm [resolvable:$true] %s156
      %162 = dma.vmem_to_hbm [thread:$0]  %s155, 512, %s157, [#allocation4], 256, 256, 16
    $region29: #{softmax_head_forward.1} parent=1 // pred_fallthru
      _
    // Predicated region
    $region30: #{softmax_head_forward.1} parent=1 // pred_check
      _
    $region31: #{softmax_head_forward.1} parent=1 // pred_check_branch
      %164 = sbr.rel (0) target = $region33
    $region32: #{softmax_head_forward.1} parent=1 // pred_region
      %166 = dma.done [#allocation4], 512
    $region33: #{softmax_head_forward.1} parent=1 // pred_fallthru
      _
    %167 = vsyncpa [#allocation3], 1
    %168 = vsyncpa [#allocation6], 1
    %169 = vsyncpa [#allocation4], 1

</llo_original>
